<compile_context>
chip_gen: v7x
topology: tpu7x:2x2x1
jax: 0.10.0
libtpu: 0.0.40
codegen_flags: <defaults>
</compile_context>

<pallas_src>
import functools

import jax
import jax.numpy as jnp
from jax.experimental import pallas as pl
from jax.experimental.pallas import tpu as pltpu


def _proj_norm_kernel(x_ref, w_ref, b_ref, g_ref, beta_ref, o_ref, *,
                      d_out, tokens_per_block):
    # x_ref:    (B_pad, d_in)                      input activations
    # w_ref:    (d_in, tokens_per_block * d_out)   packed weight chunk (maybe bf16)
    # b_ref:    (1, tokens_per_block * d_out)      bias chunk (f32)
    # g_ref:    (1, d_out)                         LayerNorm gamma (f32)
    # beta_ref: (1, d_out)                         LayerNorm beta  (f32)
    # o_ref:    (B_pad, tokens_per_block * d_out)  output chunk
    w = w_ref[...]
    x = x_ref[...].astype(w.dtype)          # bf16 x bf16 -> f32 acc when packed bf16
    y = jnp.dot(x, w, preferred_element_type=jnp.float32)
    y = y + b_ref[...].astype(jnp.float32)

    g = g_ref[...].astype(jnp.float32)
    be = beta_ref[...].astype(jnp.float32)

    # Per-token LayerNorm over the last dim (biased variance, eps=1e-5, as torch).
    # Static slices along lanes -> no relayout; tokens_per_block is small & static.
    for t in range(tokens_per_block):
        sl = slice(t * d_out, (t + 1) * d_out)
        seg = y[:, sl]
        mean = jnp.mean(seg, axis=-1, keepdims=True)
        c = seg - mean
        var = jnp.mean(c * c, axis=-1, keepdims=True)
        normed = c * jax.lax.rsqrt(var + 1e-5)
        o_ref[:, sl] = (normed * g + be).astype(o_ref.dtype)


def pack_image_proj_params(weight, bias, gamma, beta,
                           cross_attention_dim, clip_extra_context_tokens,
                           param_dtype=jnp.bfloat16):
    """One-time (load-time) re-layout of torch parameters.

    weight: (T*d_out, d_in) torch nn.Linear layout
    bias:   (T*d_out,)
    gamma, beta: (d_out,)
    Returns (w_packed (d_in, T*d_out), b_packed (1, T*d_out),
             gamma (1, d_out), beta (1, d_out)).
    """
    T = clip_extra_context_tokens
    d_out = cross_attention_dim
    N = T * d_out
    assert weight.shape[0] == N
    w_packed = jnp.asarray(weight.T, dtype=param_dtype)           # (d_in, T*d_out)
    b_packed = jnp.asarray(bias, jnp.float32).reshape(1, N)
    g2 = jnp.asarray(gamma, jnp.float32).reshape(1, d_out)
    be2 = jnp.asarray(beta, jnp.float32).reshape(1, d_out)
    return w_packed, b_packed, g2, be2


def image_proj_model_forward(image_embeds, w_packed, b_packed, gamma2, beta2,
                             cross_attention_dim, clip_extra_context_tokens,
                             out_dtype=None):
    """image_embeds: (B, clip_embeddings_dim); params from pack_image_proj_params."""
    B, d_in = image_embeds.shape
    T = clip_extra_context_tokens
    d_out = cross_attention_dim
    N = T * d_out
    assert w_packed.shape == (d_in, N)
    out_dtype = out_dtype if out_dtype is not None else image_embeds.dtype

    # Pad batch to the sublane multiple so loads/stores are unmasked.
    sub = 8 if image_embeds.dtype.itemsize == 4 else 16
    B_pad = max(sub, ((B + sub - 1) // sub) * sub)
    x = image_embeds
    if B_pad != B:
        x = jnp.pad(x, ((0, B_pad - B), (0, 0)))

    # Largest token chunk whose weight block fits a ~12 MiB per-buffer budget
    # (double-buffered by the pipeline).  Chunks >1 also give v7x a parallel
    # grid axis so both TensorCores can stream disjoint halves of the weight.
    w_bytes_per_token = d_in * d_out * w_packed.dtype.itemsize
    budget = 12 * 1024 * 1024
    tokens_per_block = 1
    for c in range(T, 0, -1):
        if T % c == 0 and c * w_bytes_per_token <= budget:
            tokens_per_block = c
            break
    n_blocks = T // tokens_per_block
    n_lanes = tokens_per_block * d_out

    # Explicit scoped-VMEM budget (double buffers + margin), capped under v7x's
    # 64 MiB physical VMEM; also lifts v5e's 16 MiB default when needed.
    x_bytes = B_pad * d_in * x.dtype.itemsize
    w_blk = tokens_per_block * w_bytes_per_token
    b_blk = n_lanes * b_packed.dtype.itemsize
    o_blk = B_pad * n_lanes * jnp.dtype(out_dtype).itemsize
    needed = 2 * (x_bytes + w_blk + b_blk + o_blk) + 2 * d_out * 4 + (4 << 20)
    vmem_limit = int(min(max(needed, 16 << 20), 56 << 20))

    out = pl.pallas_call(
        functools.partial(_proj_norm_kernel, d_out=d_out,
                          tokens_per_block=tokens_per_block),
        out_shape=jax.ShapeDtypeStruct((B_pad, N), out_dtype),
        grid_spec=pltpu.PrefetchScalarGridSpec(
            num_scalar_prefetch=0,
            grid=(n_blocks,),
            in_specs=[
                pl.BlockSpec((B_pad, d_in), lambda n: (0, 0)),   # x (whole)
                pl.BlockSpec((d_in, n_lanes), lambda n: (0, n)), # weight chunk
                pl.BlockSpec((1, n_lanes), lambda n: (0, n)),    # bias chunk
                pl.BlockSpec((1, d_out), lambda n: (0, 0)),      # gamma
                pl.BlockSpec((1, d_out), lambda n: (0, 0)),      # beta
            ],
            out_specs=pl.BlockSpec((B_pad, n_lanes), lambda n: (0, n)),
        ),
        compiler_params=pltpu.CompilerParams(
            dimension_semantics=("parallel",),
            vmem_limit_bytes=vmem_limit),
    )(x, w_packed, b_packed, gamma2, beta2)

    return out[:B].reshape(B, T, d_out)


def _reference(image_embeds, weight, bias, gamma, beta, d_out, T,
               compute_dtype=jnp.float32):
    # Mirrors the kernel's dtype handling: cast x/W to compute_dtype, f32 acc,
    # LayerNorm in f32 (biased variance, eps=1e-5) — same as torch forward.
    xc = image_embeds.astype(compute_dtype)
    wc = weight.astype(compute_dtype)
    y = jnp.dot(xc, wc.T, preferred_element_type=jnp.float32)
    y = y + bias.astype(jnp.float32)
    y = y.reshape(-1, T, d_out)
    mean = y.mean(-1, keepdims=True)
    var = ((y - mean) ** 2).mean(-1, keepdims=True)
    return (y - mean) * jax.lax.rsqrt(var + 1e-5) * gamma + beta


if __name__ == "__main__":
    # Small, module-consistent shapes (T*d_out = 128 keeps the test lane-dense).
    B = 2
    clip_embeddings_dim = 32       # D_in
    cross_attention_dim = 32       # D_out
    clip_extra_context_tokens = 4  # T

    key = jax.random.PRNGKey(0)
    k_x, k_w, k_b, k_g, k_beta = jax.random.split(key, 5)

    image_embeds = jax.random.normal(k_x, (B, clip_embeddings_dim), jnp.float32)
    # torch.nn.Linear weight layout: (out_features, in_features)
    weight = jax.random.normal(
        k_w, (clip_extra_context_tokens * cross_attention_dim, clip_embeddings_dim),
        jnp.float32) * 0.02
    bias = jax.random.normal(
        k_b, (clip_extra_context_tokens * cross_attention_dim,), jnp.float32) * 0.01
    gamma = jnp.ones((cross_attention_dim,), jnp.float32) \
        + 0.01 * jax.random.normal(k_g, (cross_attention_dim,), jnp.float32)
    beta = 0.01 * jax.random.normal(k_beta, (cross_attention_dim,), jnp.float32)

    # --- f32-packed path: strict check against the exact torch-equivalent math.
    pk_f32 = pack_image_proj_params(
        weight, bias, gamma, beta, cross_attention_dim, clip_extra_context_tokens,
        param_dtype=jnp.float32)
    out_f32 = image_proj_model_forward(
        image_embeds, *pk_f32, cross_attention_dim, clip_extra_context_tokens)
    out_f32 = jax.block_until_ready(out_f32)
    ref_f32 = _reference(image_embeds, weight, bias, gamma, beta,
                         cross_attention_dim, clip_extra_context_tokens,
                         compute_dtype=jnp.float32)
    assert out_f32.shape == (B, clip_extra_context_tokens, cross_attention_dim)
    assert jnp.allclose(out_f32, ref_f32, atol=1e-4, rtol=1e-4)

    # --- bf16-packed path (the bandwidth-optimized default): compare against a
    #     reference that applies the same bf16 rounding to x and W.
    pk_bf16 = pack_image_proj_params(
        weight, bias, gamma, beta, cross_attention_dim, clip_extra_context_tokens,
        param_dtype=jnp.bfloat16)
    out_bf16 = image_proj_model_forward(
        image_embeds, *pk_bf16, cross_attention_dim, clip_extra_context_tokens)
    out_bf16 = jax.block_until_ready(out_bf16)
    ref_bf16 = _reference(image_embeds, weight, bias, gamma, beta,
                          cross_attention_dim, clip_extra_context_tokens,
                          compute_dtype=jnp.bfloat16)
    assert out_bf16.shape == (B, clip_extra_context_tokens, cross_attention_dim)
    assert jnp.allclose(out_bf16, ref_bf16, atol=2e-2, rtol=2e-2)

    print("KERNEL_OK")
</pallas_src>

<mosaic_0001>
module attributes {stable_mosaic.version = 11 : i64} {
  func.func @_proj_norm_kernel(%arg0: i32, %arg1: memref<8x32xf32, #tpu.memory_space<vmem>>, %arg2: memref<32x128xf32, #tpu.memory_space<vmem>>, %arg3: memref<1x128xf32, #tpu.memory_space<vmem>>, %arg4: memref<1x32xf32, #tpu.memory_space<vmem>>, %arg5: memref<1x32xf32, #tpu.memory_space<vmem>>, %arg6: memref<8x128xf32, #tpu.memory_space<vmem>>) attributes {dimension_semantics = [#tpu.dimension_semantics<parallel>], iteration_bounds = array<i64: 1>, scalar_prefetch = 0 : i64, scratch_operands = 0 : i64, tpu.core_type = #tpu.core_type<tc>, window_params = [{pipeline_mode = #tpu.pipeline_mode<synchronous>, transform_indices = @transform_0, window_bounds = array<i64: 8, 32>}, {transform_indices = @transform_1, window_bounds = array<i64: 32, 128>}, {transform_indices = @transform_2, window_bounds = array<i64: 1, 128>}, {pipeline_mode = #tpu.pipeline_mode<synchronous>, transform_indices = @transform_3, window_bounds = array<i64: 1, 32>}, {pipeline_mode = #tpu.pipeline_mode<synchronous>, transform_indices = @transform_4, window_bounds = array<i64: 1, 32>}, {transform_indices = @transform_5, window_bounds = array<i64: 8, 128>}]} {
    %c0 = arith.constant 0 : index
    %c0_0 = arith.constant 0 : index
    %0 = vector.load %arg2[%c0, %c0_0] : memref<32x128xf32, #tpu.memory_space<vmem>>, vector<32x128xf32>
    %c0_1 = arith.constant 0 : index
    %c0_2 = arith.constant 0 : index
    %1 = vector.load %arg1[%c0_1, %c0_2] : memref<8x32xf32, #tpu.memory_space<vmem>>, vector<8x32xf32>
    %cst = arith.constant dense<0.000000e+00> : vector<8x128xf32>
    %2 = tpu.matmul %1, %0, %cst {dimension_numbers = #tpu.dot_dimension_numbers<[1], [0], [0], [1], [0, 0, 1, 1], [], []>} : vector<8x32xf32>, vector<32x128xf32>, vector<8x128xf32> -> vector<8x128xf32>
    %c0_3 = arith.constant 0 : index
    %c0_4 = arith.constant 0 : index
    %3 = vector.load %arg3[%c0_3, %c0_4] : memref<1x128xf32, #tpu.memory_space<vmem>>, vector<1x128xf32>
    %4 = vector.broadcast %3 : vector<1x128xf32> to vector<8x128xf32>
    %5 = arith.addf %2, %4 : vector<8x128xf32>
    %c0_5 = arith.constant 0 : index
    %c0_6 = arith.constant 0 : index
    %6 = vector.load %arg4[%c0_5, %c0_6] : memref<1x32xf32, #tpu.memory_space<vmem>>, vector<1x32xf32>
    %c0_7 = arith.constant 0 : index
    %c0_8 = arith.constant 0 : index
    %7 = vector.load %arg5[%c0_7, %c0_8] : memref<1x32xf32, #tpu.memory_space<vmem>>, vector<1x32xf32>
    %8 = vector.extract_strided_slice %5 {offsets = [0, 0], sizes = [8, 32], strides = [1, 1]} : vector<8x128xf32> to vector<8x32xf32>
    %cst_9 = arith.constant dense<0.000000e+00> : vector<8xf32>
    %9 = vector.multi_reduction <add>, %8, %cst_9 [1] : vector<8x32xf32> to vector<8xf32>
    %10 = vector.shape_cast %9 : vector<8xf32> to vector<8x1xf32>
    %cst_10 = arith.constant 3.200000e+01 : f32
    %11 = vector.broadcast %cst_10 : f32 to vector<8x1xf32>
    %12 = arith.divf %10, %11 : vector<8x1xf32>
    %13 = vector.broadcast %12 : vector<8x1xf32> to vector<8x32xf32>
    %14 = arith.subf %8, %13 : vector<8x32xf32>
    %15 = arith.mulf %14, %14 : vector<8x32xf32>
    %cst_11 = arith.constant dense<0.000000e+00> : vector<8xf32>
    %16 = vector.multi_reduction <add>, %15, %cst_11 [1] : vector<8x32xf32> to vector<8xf32>
    %17 = vector.shape_cast %16 : vector<8xf32> to vector<8x1xf32>
    %cst_12 = arith.constant 3.200000e+01 : f32
    %18 = vector.broadcast %cst_12 : f32 to vector<8x1xf32>
    %19 = arith.divf %17, %18 : vector<8x1xf32>
    %cst_13 = arith.constant 9.99999974E-6 : f32
    %20 = vector.broadcast %cst_13 : f32 to vector<8x1xf32>
    %21 = arith.addf %19, %20 : vector<8x1xf32>
    %22 = math.rsqrt %21 : vector<8x1xf32>
    %23 = vector.broadcast %22 : vector<8x1xf32> to vector<8x32xf32>
    %24 = arith.mulf %14, %23 : vector<8x32xf32>
    %25 = vector.broadcast %6 : vector<1x32xf32> to vector<8x32xf32>
    %26 = arith.mulf %24, %25 : vector<8x32xf32>
    %27 = vector.broadcast %7 : vector<1x32xf32> to vector<8x32xf32>
    %28 = arith.addf %26, %27 : vector<8x32xf32>
    %c0_14 = arith.constant 0 : index
    %c0_15 = arith.constant 0 : index
    %29 = vector.load %arg6[%c0_14, %c0_15] : memref<8x128xf32, #tpu.memory_space<vmem>>, vector<8x32xf32>
    tpu.vector_store %arg6[%c0_14, %c0_15], %28 {strides = array<i32>} : memref<8x128xf32, #tpu.memory_space<vmem>>, vector<8x32xf32>,
    %30 = vector.extract_strided_slice %5 {offsets = [0, 32], sizes = [8, 32], strides = [1, 1]} : vector<8x128xf32> to vector<8x32xf32>
    %cst_16 = arith.constant dense<0.000000e+00> : vector<8xf32>
    %31 = vector.multi_reduction <add>, %30, %cst_16 [1] : vector<8x32xf32> to vector<8xf32>
    %32 = vector.shape_cast %31 : vector<8xf32> to vector<8x1xf32>
    %cst_17 = arith.constant 3.200000e+01 : f32
    %33 = vector.broadcast %cst_17 : f32 to vector<8x1xf32>
    %34 = arith.divf %32, %33 : vector<8x1xf32>
    %35 = vector.broadcast %34 : vector<8x1xf32> to vector<8x32xf32>
    %36 = arith.subf %30, %35 : vector<8x32xf32>
    %37 = arith.mulf %36, %36 : vector<8x32xf32>
    %cst_18 = arith.constant dense<0.000000e+00> : vector<8xf32>
    %38 = vector.multi_reduction <add>, %37, %cst_18 [1] : vector<8x32xf32> to vector<8xf32>
    %39 = vector.shape_cast %38 : vector<8xf32> to vector<8x1xf32>
    %cst_19 = arith.constant 3.200000e+01 : f32
    %40 = vector.broadcast %cst_19 : f32 to vector<8x1xf32>
    %41 = arith.divf %39, %40 : vector<8x1xf32>
    %cst_20 = arith.constant 9.99999974E-6 : f32
    %42 = vector.broadcast %cst_20 : f32 to vector<8x1xf32>
    %43 = arith.addf %41, %42 : vector<8x1xf32>
    %44 = math.rsqrt %43 : vector<8x1xf32>
    %45 = vector.broadcast %44 : vector<8x1xf32> to vector<8x32xf32>
    %46 = arith.mulf %36, %45 : vector<8x32xf32>
    %47 = vector.broadcast %6 : vector<1x32xf32> to vector<8x32xf32>
    %48 = arith.mulf %46, %47 : vector<8x32xf32>
    %49 = vector.broadcast %7 : vector<1x32xf32> to vector<8x32xf32>
    %50 = arith.addf %48, %49 : vector<8x32xf32>
    %c0_21 = arith.constant 0 : index
    %c32 = arith.constant 32 : index
    %51 = vector.load %arg6[%c0_21, %c32] : memref<8x128xf32, #tpu.memory_space<vmem>>, vector<8x32xf32>
    tpu.vector_store %arg6[%c0_21, %c32], %50 {strides = array<i32>} : memref<8x128xf32, #tpu.memory_space<vmem>>, vector<8x32xf32>,
    %52 = vector.extract_strided_slice %5 {offsets = [0, 64], sizes = [8, 32], strides = [1, 1]} : vector<8x128xf32> to vector<8x32xf32>
    %cst_22 = arith.constant dense<0.000000e+00> : vector<8xf32>
    %53 = vector.multi_reduction <add>, %52, %cst_22 [1] : vector<8x32xf32> to vector<8xf32>
    %54 = vector.shape_cast %53 : vector<8xf32> to vector<8x1xf32>
    %cst_23 = arith.constant 3.200000e+01 : f32
    %55 = vector.broadcast %cst_23 : f32 to vector<8x1xf32>
    %56 = arith.divf %54, %55 : vector<8x1xf32>
    %57 = vector.broadcast %56 : vector<8x1xf32> to vector<8x32xf32>
    %58 = arith.subf %52, %57 : vector<8x32xf32>
    %59 = arith.mulf %58, %58 : vector<8x32xf32>
    %cst_24 = arith.constant dense<0.000000e+00> : vector<8xf32>
    %60 = vector.multi_reduction <add>, %59, %cst_24 [1] : vector<8x32xf32> to vector<8xf32>
    %61 = vector.shape_cast %60 : vector<8xf32> to vector<8x1xf32>
    %cst_25 = arith.constant 3.200000e+01 : f32
    %62 = vector.broadcast %cst_25 : f32 to vector<8x1xf32>
    %63 = arith.divf %61, %62 : vector<8x1xf32>
    %cst_26 = arith.constant 9.99999974E-6 : f32
    %64 = vector.broadcast %cst_26 : f32 to vector<8x1xf32>
    %65 = arith.addf %63, %64 : vector<8x1xf32>
    %66 = math.rsqrt %65 : vector<8x1xf32>
    %67 = vector.broadcast %66 : vector<8x1xf32> to vector<8x32xf32>
    %68 = arith.mulf %58, %67 : vector<8x32xf32>
    %69 = vector.broadcast %6 : vector<1x32xf32> to vector<8x32xf32>
    %70 = arith.mulf %68, %69 : vector<8x32xf32>
    %71 = vector.broadcast %7 : vector<1x32xf32> to vector<8x32xf32>
    %72 = arith.addf %70, %71 : vector<8x32xf32>
    %c0_27 = arith.constant 0 : index
    %c64 = arith.constant 64 : index
    %73 = vector.load %arg6[%c0_27, %c64] : memref<8x128xf32, #tpu.memory_space<vmem>>, vector<8x32xf32>
    tpu.vector_store %arg6[%c0_27, %c64], %72 {strides = array<i32>} : memref<8x128xf32, #tpu.memory_space<vmem>>, vector<8x32xf32>,
    %74 = vector.extract_strided_slice %5 {offsets = [0, 96], sizes = [8, 32], strides = [1, 1]} : vector<8x128xf32> to vector<8x32xf32>
    %cst_28 = arith.constant dense<0.000000e+00> : vector<8xf32>
    %75 = vector.multi_reduction <add>, %74, %cst_28 [1] : vector<8x32xf32> to vector<8xf32>
    %76 = vector.shape_cast %75 : vector<8xf32> to vector<8x1xf32>
    %cst_29 = arith.constant 3.200000e+01 : f32
    %77 = vector.broadcast %cst_29 : f32 to vector<8x1xf32>
    %78 = arith.divf %76, %77 : vector<8x1xf32>
    %79 = vector.broadcast %78 : vector<8x1xf32> to vector<8x32xf32>
    %80 = arith.subf %74, %79 : vector<8x32xf32>
    %81 = arith.mulf %80, %80 : vector<8x32xf32>
    %cst_30 = arith.constant dense<0.000000e+00> : vector<8xf32>
    %82 = vector.multi_reduction <add>, %81, %cst_30 [1] : vector<8x32xf32> to vector<8xf32>
    %83 = vector.shape_cast %82 : vector<8xf32> to vector<8x1xf32>
    %cst_31 = arith.constant 3.200000e+01 : f32
    %84 = vector.broadcast %cst_31 : f32 to vector<8x1xf32>
    %85 = arith.divf %83, %84 : vector<8x1xf32>
    %cst_32 = arith.constant 9.99999974E-6 : f32
    %86 = vector.broadcast %cst_32 : f32 to vector<8x1xf32>
    %87 = arith.addf %85, %86 : vector<8x1xf32>
    %88 = math.rsqrt %87 : vector<8x1xf32>
    %89 = vector.broadcast %88 : vector<8x1xf32> to vector<8x32xf32>
    %90 = arith.mulf %80, %89 : vector<8x32xf32>
    %91 = vector.broadcast %6 : vector<1x32xf32> to vector<8x32xf32>
    %92 = arith.mulf %90, %91 : vector<8x32xf32>
    %93 = vector.broadcast %7 : vector<1x32xf32> to vector<8x32xf32>
    %94 = arith.addf %92, %93 : vector<8x32xf32>
    %c0_33 = arith.constant 0 : index
    %c96 = arith.constant 96 : index
    %95 = vector.load %arg6[%c0_33, %c96] : memref<8x128xf32, #tpu.memory_space<vmem>>, vector<8x32xf32>
    tpu.vector_store %arg6[%c0_33, %c96], %94 {strides = array<i32>} : memref<8x128xf32, #tpu.memory_space<vmem>>, vector<8x32xf32>,
    return
  }
  func.func @transform_0(%arg0: i32) -> (i32, i32) {
    %c0_i32 = arith.constant 0 : i32
    %c0_i32_0 = arith.constant 0 : i32
    %c0_i32_1 = arith.constant 0 : i32
    return %c0_i32, %c0_i32_0 : i32, i32
  }
  func.func @transform_1(%arg0: i32) -> (i32, i32) {
    %c0_i32 = arith.constant 0 : i32
    %c0_i32_0 = arith.constant 0 : i32
    return %c0_i32, %arg0 : i32, i32
  }
  func.func @transform_2(%arg0: i32) -> (i32, i32) {
    %c0_i32 = arith.constant 0 : i32
    %c0_i32_0 = arith.constant 0 : i32
    return %c0_i32, %arg0 : i32, i32
  }
  func.func @transform_3(%arg0: i32) -> (i32, i32) {
    %c0_i32 = arith.constant 0 : i32
    %c0_i32_0 = arith.constant 0 : i32
    %c0_i32_1 = arith.constant 0 : i32
    return %c0_i32, %c0_i32_0 : i32, i32
  }
  func.func @transform_4(%arg0: i32) -> (i32, i32) {
    %c0_i32 = arith.constant 0 : i32
    %c0_i32_0 = arith.constant 0 : i32
    %c0_i32_1 = arith.constant 0 : i32
    return %c0_i32, %c0_i32_0 : i32, i32
  }
  func.func @transform_5(%arg0: i32) -> (i32, i32) {
    %c0_i32 = arith.constant 0 : i32
    %c0_i32_0 = arith.constant 0 : i32
    return %c0_i32, %arg0 : i32, i32
  }
}

</mosaic_0001>

<llo_original>
// kernel: tpu_custom_call.1
$region0: #{tpu_custom_call.1}
  #allocation0 [shape = 'u32[]', space=smem, size = 0x4, offset = 0x4, fixed_abs, tag = 'smem constant byte address 0x4 - core index']
  #allocation1 [shape = 'u32[144,128]{1,0:T(1,128)}', space=vmem, size = 0x12000, scoped, tag = 'internal scratch']
  %s0 = inlined_call_operand.hbm [shape: f32[8,32], index: 0, kind: input, shape index: {}]
  %s1 = inlined_call_operand.hbm [shape: f32[32,128], index: 1, kind: input, shape index: {}]
  %s2 = inlined_call_operand.vmem [shape: f32[1,128], index: 2, kind: input, shape index: {}]
  %s3 = inlined_call_operand.vmem [shape: f32[1,32], index: 3, kind: input, shape index: {}]
  %s4 = inlined_call_operand.vmem [shape: f32[1,32], index: 4, kind: input, shape index: {}]
  %s5 = inlined_call_operand.hbm [shape: f32[8,128], index: 5, kind: output, shape index: {}]
  %s6 = sld [smem:[#allocation0]]
  $region38: #{tpu_custom_call.1} parent=0
    _
  %s8 = ssub.s32 1, %s6
  %s9 = scalar_select 0, %s8, %s6
  $region1: #{tpu_custom_call.1} parent=0
    #allocation2 [shape = 'u8[4096]{0}', space=vmem, size = 0x1000, scoped, tag = 'input window, operand 0, single buffered']
    #allocation3 [shape = 's32[1]{0}', space=sflag, size = 0x4, scoped, tag = 'scoped memory for tpu_custom_call.1']
    #allocation4 [shape = 's32[1]{0}', space=sflag, size = 0x4, scoped, tag = 'scoped memory for tpu_custom_call.1']
    #allocation5 [shape = 'u8[16384]{0}', space=vmem, size = 0x4000, scoped, tag = 'input window, operand 1, single buffered']
    #allocation6 [shape = 's32[1]{0}', space=sflag, size = 0x4, scoped, tag = 'scoped memory for tpu_custom_call.1']
    #allocation7 [shape = 'u8[4096]{0}', space=vmem, size = 0x1000, scoped, tag = 'output window, operand 0, single buffered']
    %10 = vsyncpa [#allocation3], 0
    %11 = vsyncpa [#allocation6], 0
    %12 = vsyncpa [#allocation4], 0
    // Predicated region
    $region2: #{tpu_custom_call.1} parent=1 // pred_check
      _
    $region3: #{tpu_custom_call.1} parent=1 // pred_check_branch
      %14 = sbr.rel (0) target = $region5
    $region4: #{tpu_custom_call.1} parent=1 // pred_region
      %s16 = ssub.s32 128, 128
      %17 = vsyncadd [#allocation3], %s16
      %s19 = sshll.u32 [#allocation2], 4
      %s20 = int_to_ptr.vmem [resolvable:$true] %s19
      %22 = dma.hbm_to_vmem [thread:$0]  %s0, 128, %s20, [#allocation3]
    $region5: #{tpu_custom_call.1} parent=1 // pred_fallthru
      _
    // Predicated region
    $region6: #{tpu_custom_call.1} parent=1 // pred_check
      _
    $region7: #{tpu_custom_call.1} parent=1 // pred_check_branch
      %24 = sbr.rel (0) target = $region9
    $region8: #{tpu_custom_call.1} parent=1 // pred_region
      %s26 = ssub.s32 512, 512
      %27 = vsyncadd [#allocation6], %s26
      %s28 = sshll.u32 [#allocation5], 4
      %s29 = int_to_ptr.vmem [resolvable:$true] %s28
      %34 = dma.hbm_to_vmem [thread:$0]  %s1, 512, %s29, [#allocation6], 128, 128, 8
    $region9: #{tpu_custom_call.1} parent=1 // pred_fallthru
      _
    // Predicated region
    $region10: #{tpu_custom_call.1} parent=1 // pred_check
      _
    $region11: #{tpu_custom_call.1} parent=1 // pred_check_branch
      %36 = sbr.rel (0) target = $region13
    $region12: #{tpu_custom_call.1} parent=1 // pred_region
      _
    $region13: #{tpu_custom_call.1} parent=1 // pred_fallthru
      _
    // Predicated region
    $region14: #{tpu_custom_call.1} parent=1 // pred_check
      _
    $region15: #{tpu_custom_call.1} parent=1 // pred_check_branch
      %38 = sbr.rel (0) target = $region17
    $region16: #{tpu_custom_call.1} parent=1 // pred_region
      _
    $region17: #{tpu_custom_call.1} parent=1 // pred_fallthru
      _
    // Predicated region
    $region18: #{tpu_custom_call.1} parent=1 // pred_check
      _
    $region19: #{tpu_custom_call.1} parent=1 // pred_check_branch
      %40 = sbr.rel (0) target = $region21
    $region20: #{tpu_custom_call.1} parent=1 // pred_region
      _
    $region21: #{tpu_custom_call.1} parent=1 // pred_fallthru
      _
    // Predicated region
    $region22: #{tpu_custom_call.1} parent=1 // pred_check
      _
    $region23: #{tpu_custom_call.1} parent=1 // pred_check_branch
      %42 = sbr.rel (0) target = $region25
    $region24: #{tpu_custom_call.1} parent=1 // pred_region
      %43 = dma.done [#allocation3], 128
    $region25: #{tpu_custom_call.1} parent=1 // pred_fallthru
      _
    // Predicated region
    $region26: #{tpu_custom_call.1} parent=1 // pred_check
      _
    $region27: #{tpu_custom_call.1} parent=1 // pred_check_branch
      %45 = sbr.rel (0) target = $region29
    $region28: #{tpu_custom_call.1} parent=1 // pred_region
      %46 = dma.done [#allocation6], 512
    $region29: #{tpu_custom_call.1} parent=1 // pred_fallthru
      _
    %v47 = vld [vmem:[#allocation5] sm:$0xff]
    %v48 = vld [vmem:[#allocation5 + $0x8] sm:$0xff]
    %v49 = vld [vmem:[#allocation5 + $0x10] sm:$0xff]
    %v50 = vld [vmem:[#allocation5 + $0x18] sm:$0xff]
    %v51 = vld [vmem:[#allocation2] sm:$0xff]
    %v52 = vld [vmem:[%s2] sm:$0x1]
    %v54 = vlaneseq
    %v55 = vshrl.u32 %v54, 7
    %v56 = vsub.s32 0, %v55
    %v57 = vrot.slane %v52, %v56
    %vm59 = vcmask 261120
    %v61 = vsel %vm59, %v51, 0
    %63 = vmatprep.subr.mxu0 0.0
    %64 = vmatpush1.msra.mxu0 %v47
    %65 = vmatprep.subr.mxu0 0.0
    %66 = vmatpush1.msra.mxu0 %v48
    %67 = vmatprep.subr.mxu0 0.0
    %68 = vmatpush1.msra.mxu0 %v49
    %69 = vmatprep.subr.mxu0 0.0
    %70 = vmatpush1.msra.mxu0 %v50
    %71 = vmatprep.subr.mxu0 0.0
    %72 = vmatpush1.msra.mxu0 0.0
    %73 = vmatprep.subr.mxu0 0.0
    %74 = vmatpush1.msra.mxu0 0.0
    %75 = vmatprep.subr.mxu0 0.0
    %76 = vmatpush1.msra.mxu0 0.0
    %77 = vmatprep.subr.mxu0 0.0
    %78 = vmatpush1.msra.mxu0 0.0
    %79 = vmatprep.subr.mxu0 0.0
    %80 = vmatpush1.msra.mxu0 0.0
    %81 = vmatprep.subr.mxu0 0.0
    %82 = vmatpush1.msra.mxu0 0.0
    %83 = vmatprep.subr.mxu0 0.0
    %84 = vmatpush1.msra.mxu0 0.0
    %85 = vmatprep.subr.mxu0 0.0
    %86 = vmatpush1.msra.mxu0 0.0
    %87 = vmatprep.subr.mxu0 0.0
    %88 = vmatpush1.msra.mxu0 0.0
    %89 = vmatprep.subr.mxu0 0.0
    %90 = vmatpush1.msra.mxu0 0.0
    %91 = vmatprep.subr.mxu0 0.0
    %92 = vmatpush1.msra.mxu0 0.0
    %93 = vmatprep.subr.mxu0 0.0
    %94 = vmatpush1.msra.mxu0 0.0
    %95 = vmatprep.subr.mxu0 0.0
    %96 = vmatpush1.msra.mxu0 0.0
    %97 = vmatprep.subr.mxu0 0.0
    %98 = vmatpush1.msra.mxu0 0.0
    %99 = vmatprep.subr.mxu0 0.0
    %100 = vmatpush1.msra.mxu0 0.0
    %101 = vmatprep.subr.mxu0 0.0
    %102 = vmatpush1.msra.mxu0 0.0
    %103 = vmatprep.subr.mxu0 0.0
    %104 = vmatpush1.msra.mxu0 0.0
    %105 = vmatprep.subr.mxu0 0.0
    %106 = vmatpush1.msra.mxu0 0.0
    %107 = vmatprep.subr.mxu0 0.0
    %108 = vmatpush1.msra.mxu0 0.0
    %109 = vmatprep.subr.mxu0 0.0
    %110 = vmatpush1.msra.mxu0 0.0
    %111 = vmatprep.subr.mxu0 0.0
    %112 = vmatpush1.msra.mxu0 0.0
    %113 = vmatprep.subr.mxu0 0.0
    %114 = vmatpush1.msra.mxu0 0.0
    %115 = vmatprep.subr.mxu0 0.0
    %116 = vmatpush1.msra.mxu0 0.0
    %117 = vmatprep.subr.mxu0 0.0
    %118 = vmatpush1.msra.mxu0 0.0
    %119 = vmatprep.subr.mxu0 0.0
    %120 = vmatpush1.msra.mxu0 0.0
    %121 = vmatprep.subr.mxu0 0.0
    %122 = vmatpush1.msra.mxu0 0.0
    %123 = vmatprep.subr.mxu0 0.0
    %124 = vmatpush1.msra.mxu0 0.0
    %125 = vmatprep.subr.mxu0 0.0
    %126 = vmatpush1.msra.mxu0 0.0
    %127 = vmatprep.mubr.f32.mxu0 0.0
    %128 = vmatmul.mubr.f32.gmra.mrb[0].mxu0 %v61
    %v129 = vpop.f32.mrb[0].mxu0
    %v130 = vadd.f32 %v57, %v129
    %v131 = vpop.f32.mrb[0].mxu0
    %132 = vdwg.mxu0
    %v133 = vld [vmem:[%s3] sm:$0x1]
    %v134 = vld [vmem:[%s4] sm:$0x1]
    %v135 = vsel %vm59, %v130, 0.0
    %136 = vadd.xlane.f32.xlu0 %v135
    %v137 = vpop.xlane.xlu0 %136
    %v138 = vrcp.pop 32.0
    %v139 = vmul.f32 %v137, %v138
    %v140 = vsub.f32 %v130, %v139
    %v141 = vmul.f32 %v140, %v140
    %v142 = vsel %vm59, %v141, 0.0
    %143 = vadd.xlane.f32.xlu0 %v142
    %v144 = vpop.xlane.xlu0 %143
    %v145 = vmul.f32 %v144, %v138
    %v146 = vadd.f32 %v145, 1e-05
    %v147 = vrsqrt.pop %v146
    %v148 = vmul.f32 %v140, %v147
    %v150 = vlaneseq
    %v151 = vshrl.u32 %v150, 7
    %v152 = vsub.s32 0, %v151
    %v153 = vrot.slane %v133, %v152
    %v155 = vmul.f32 %v148, %v153
    %v157 = vlaneseq
    %v158 = vshrl.u32 %v157, 7
    %v159 = vsub.s32 0, %v158
    %v160 = vrot.slane %v134, %v159
    %v162 = vadd.f32 %v155, %v160
    %163 = vst.msk [vmem:[#allocation7] sm:$0xff] %vm59, %v162
    %165 = vrot.lane.b32.xlu0 %v130, 96
    %v166 = vpop.permute.xlu0 %165
    %v168 = vsel %vm59, %v166, 0.0
    %169 = vadd.xlane.f32.xlu0 %v168
    %v170 = vpop.xlane.xlu0 %169
    %v171 = vmul.f32 %v170, %v138
    %v172 = vsub.f32 %v130, %v171
    %v173 = vmul.f32 %v172, %v172
    %175 = vrot.lane.b32.xlu0 %v173, 96
    %v176 = vpop.permute.xlu0 %175
    %v178 = vsel %vm59, %v176, 0.0
    %179 = vadd.xlane.f32.xlu0 %v178
    %v180 = vpop.xlane.xlu0 %179
    %v181 = vmul.f32 %v180, %v138
    %v182 = vadd.f32 %v181, 1e-05
    %v183 = vrsqrt.pop %v182
    %v184 = vmul.f32 %v172, %v183
    %185 = vrot.lane.b32.xlu0 %v153, 32
    %v186 = vpop.permute.xlu0 %185
    %v188 = vmul.f32 %v184, %v186
    %189 = vrot.lane.b32.xlu0 %v160, 32
    %v190 = vpop.permute.xlu0 %189
    %v192 = vadd.f32 %v188, %v190
    %vm193 = vcmask 523520
    %194 = vst.msk [vmem:[#allocation7] sm:$0xff] %vm193, %v192
    %195 = vrot.lane.b32.xlu0 %v130, 64
    %v196 = vpop.permute.xlu0 %195
    %v198 = vsel %vm59, %v196, 0.0
    %199 = vadd.xlane.f32.xlu0 %v198
    %v200 = vpop.xlane.xlu0 %199
    %v201 = vmul.f32 %v200, %v138
    %v202 = vsub.f32 %v130, %v201
    %v203 = vmul.f32 %v202, %v202
    %205 = vrot.lane.b32.xlu0 %v203, 64
    %v206 = vpop.permute.xlu0 %205
    %v208 = vsel %vm59, %v206, 0.0
    %209 = vadd.xlane.f32.xlu0 %v208
    %v210 = vpop.xlane.xlu0 %209
    %v211 = vmul.f32 %v210, %v138
    %v212 = vadd.f32 %v211, 1e-05
    %v213 = vrsqrt.pop %v212
    %v214 = vmul.f32 %v202, %v213
    %215 = vrot.lane.b32.xlu0 %v153, 64
    %v216 = vpop.permute.xlu0 %215
    %v218 = vmul.f32 %v214, %v216
    %219 = vrot.lane.b32.xlu0 %v160, 64
    %v220 = vpop.permute.xlu0 %219
    %v222 = vadd.f32 %v218, %v220
    %vm223 = vcmask 785920
    %224 = vst.msk [vmem:[#allocation7] sm:$0xff] %vm223, %v222
    %225 = vrot.lane.b32.xlu0 %v130, 32
    %v226 = vpop.permute.xlu0 %225
    %v228 = vsel %vm59, %v226, 0.0
    %229 = vadd.xlane.f32.xlu0 %v228
    %v230 = vpop.xlane.xlu0 %229
    %v231 = vmul.f32 %v230, %v138
    %v232 = vsub.f32 %v130, %v231
    %v233 = vmul.f32 %v232, %v232
    %235 = vrot.lane.b32.xlu0 %v233, 32
    %v236 = vpop.permute.xlu0 %235
    %v238 = vsel %vm59, %v236, 0.0
    %239 = vadd.xlane.f32.xlu0 %v238
    %v240 = vpop.xlane.xlu0 %239
    %v241 = vmul.f32 %v240, %v138
    %v242 = vadd.f32 %v241, 1e-05
    %v243 = vrsqrt.pop %v242
    %v244 = vmul.f32 %v232, %v243
    %245 = vrot.lane.b32.xlu0 %v153, 96
    %v246 = vpop.permute.xlu0 %245
    %v248 = vmul.f32 %v244, %v246
    %249 = vrot.lane.b32.xlu0 %v160, 96
    %v250 = vpop.permute.xlu0 %249
    %v252 = vadd.f32 %v248, %v250
    %vm253 = vcmask 1048320
    %254 = vst.msk [vmem:[#allocation7] sm:$0xff] %vm253, %v252
    // Predicated region
    $region30: #{tpu_custom_call.1} parent=1 // pred_check
      _
    $region31: #{tpu_custom_call.1} parent=1 // pred_check_branch
      %256 = sbr.rel (0) target = $region33
    $region32: #{tpu_custom_call.1} parent=1 // pred_region
      %s258 = ssub.s32 128, 128
      %259 = vsyncadd [#allocation4], %s258
      %s261 = sshll.u32 [#allocation7], 4
      %s262 = int_to_ptr.vmem [resolvable:$true] %s261
      %264 = dma.vmem_to_hbm [thread:$0]  %s262, 128, %s5, [#allocation4]
    $region33: #{tpu_custom_call.1} parent=1 // pred_fallthru
      _
    // Predicated region
    $region34: #{tpu_custom_call.1} parent=1 // pred_check
      _
    $region35: #{tpu_custom_call.1} parent=1 // pred_check_branch
      %266 = sbr.rel (0) target = $region37
    $region36: #{tpu_custom_call.1} parent=1 // pred_region
      %267 = dma.done [#allocation4], 128
    $region37: #{tpu_custom_call.1} parent=1 // pred_fallthru
      _
    %268 = vsyncpa [#allocation3], 1
    %269 = vsyncpa [#allocation6], 1
    %270 = vsyncpa [#allocation4], 1

</llo_original>
